<compile_context>
chip_gen: v5e
topology: v5e:2x2
jax: 0.10.0
libtpu: 0.0.40
codegen_flags: <defaults>
</compile_context>

<pallas_src>
import jax
import jax.numpy as jnp
import numpy as np
from jax.experimental import pallas as pl
from jax.experimental.pallas import tpu as pltpu


def _policy_kernel(x_ref, w1c_ref, b1c_ref, w2s_ref, b2s_ref, wh_ref, bh_ref,
                   out_ref):
    """Both hierarchy branches + combined Laplace params in one kernel body.

    x_ref   : [B, 2S]           shared input
    w1c_ref : [2S, 2*H1]        layer-1 weights, branch3 cols [0:H1], branch2 [H1:2H1]
    b1c_ref : [1, 2*H1]
    w2s_ref : [2, H1, H2]       layer-2 weights stacked (0 = branch3, 1 = branch2)
    b2s_ref : [2, 1, H2]
    wh_ref  : [2, H2, 2*S]      fused head weights per branch: [Wm || Ws]
    bh_ref  : [2, 1, 2*S]
    out_ref : [B, 6*S]          [mean_c | scale_c | mean2 | scale2 | mean3 | scale3]
    """
    H1 = w2s_ref.shape[1]
    S = wh_ref.shape[2] // 2

    x = x_ref[...]                                                      # [B, 2S]
    # Fused layer 1 (both branches in one MXU push).
    h1 = jnp.dot(x, w1c_ref[...], preferred_element_type=jnp.float32) + b1c_ref[...]
    h1 = jnp.maximum(h1, 0.0)                                           # [B, 2*H1]

    def branch(k):
        h1k = h1[:, k * H1:(k + 1) * H1]                                # [B, H1]
        h2 = jnp.dot(h1k, w2s_ref[k],
                     preferred_element_type=jnp.float32) + b2s_ref[k]
        h2 = jnp.maximum(h2, 0.0)                                       # [B, H2]
        heads = jnp.dot(h2, wh_ref[k],
                        preferred_element_type=jnp.float32) + bh_ref[k]  # [B, 2S]
        mean = heads[:, :S]
        scale = jnp.exp(jnp.clip(heads[:, S:], -20.0, 2.0))
        return mean, scale

    m3, s3 = branch(0)   # hierarchy3_forth
    m2, s2 = branch(1)   # hierarchy2_forth
    mc = (m2 + m3) * 0.5
    sc = (s2 + s3) * 0.5

    # Single lane-contiguous output slab -> one write-back DMA.
    out_ref[...] = jnp.concatenate([mc, sc, m2, s2, m3, s3], axis=-1)


def pack_params(params):
    """Pre-pack stacked branch params (leading axis 2: [branch3, branch2]) into
    the fused slabs the kernel consumes. Do this once, outside the hot loop."""
    w1c = jnp.concatenate([params["w1"][0], params["w1"][1]], axis=-1)   # [2S, 2H1]
    b1c = jnp.concatenate([params["b1"][0], params["b1"][1]], axis=-1)   # [1, 2H1]
    w2s = params["w2"]                                                   # [2, H1, H2]
    b2s = params["b2"]                                                   # [2, 1, H2]
    wh = jnp.concatenate([params["wm"], params["ws"]], axis=-1)          # [2, H2, 2S]
    bh = jnp.concatenate([params["bm"], params["bs"]], axis=-1)          # [2, 1, 2S]
    return (w1c, b1c, w2s, b2s, wh, bh)


def laplace_policy_forward(state, goal, packed):
    """Returns ((mean_c, scale_c), (mean2, scale2), (mean3, scale3)) — the
    (loc, scale) pairs standing in for the torch Laplace distribution objects."""
    w1c, b1c, w2s, b2s, wh, bh = packed
    x = jnp.concatenate([state, goal], axis=-1)                          # [B, 2S]
    B = x.shape[0]
    S = wh.shape[-1] // 2

    vmem = pl.BlockSpec(memory_space=pltpu.MemorySpace.VMEM)
    out = pl.pallas_call(
        _policy_kernel,
        out_shape=jax.ShapeDtypeStruct((B, 6 * S), jnp.float32),
        in_specs=[vmem] * 7,
        out_specs=vmem,
    )(x, w1c, b1c, w2s, b2s, wh, bh)

    mc, sc = out[:, 0 * S:1 * S], out[:, 1 * S:2 * S]
    m2, s2 = out[:, 2 * S:3 * S], out[:, 3 * S:4 * S]
    m3, s3 = out[:, 4 * S:5 * S], out[:, 5 * S:6 * S]
    return (mc, sc), (m2, s2), (m3, s3)


def _init_linear(key, fan_in, fan_out):
    # Mimic torch.nn.Linear default init: U(-1/sqrt(fan_in), 1/sqrt(fan_in)).
    kw, kb = jax.random.split(key)
    lim = 1.0 / np.sqrt(fan_in)
    w = jax.random.uniform(kw, (fan_in, fan_out), jnp.float32, -lim, lim)
    b = jax.random.uniform(kb, (1, fan_out), jnp.float32, -lim, lim)
    return w, b


def make_params(key, state_dim, hidden_dims):
    twoS, H1, H2 = 2 * state_dim, hidden_dims[0], hidden_dims[1]
    keys = jax.random.split(key, 8)

    def branch(ks):
        w1, b1 = _init_linear(ks[0], twoS, H1)
        w2, b2 = _init_linear(ks[1], H1, H2)
        wm, bm = _init_linear(ks[2], H2, state_dim)
        ws, bs = _init_linear(ks[3], H2, state_dim)
        return dict(w1=w1, b1=b1, w2=w2, b2=b2, wm=wm, bm=bm, ws=ws, bs=bs)

    b3 = branch(keys[0:4])   # hierarchy3_forth branch
    b2 = branch(keys[4:8])   # hierarchy2_forth branch
    # Stack branch params along leading axis: index 0 = branch3, 1 = branch2.
    return {k: jnp.stack([b3[k], b2[k]], axis=0) for k in b3}


def _reference(state, goal, params):
    x = jnp.concatenate([state, goal], axis=-1)

    def branch(i):
        h = jnp.maximum(x @ params["w1"][i] + params["b1"][i], 0.0)
        h = jnp.maximum(h @ params["w2"][i] + params["b2"][i], 0.0)
        mean = h @ params["wm"][i] + params["bm"][i]
        scale = jnp.exp(jnp.clip(h @ params["ws"][i] + params["bs"][i], -20.0, 2.0))
        return mean, scale

    m3, s3 = branch(0)
    m2, s2 = branch(1)
    return ((m2 + m3) / 2, (s2 + s3) / 2), (m2, s2), (m3, s3)


if __name__ == "__main__":
    B, state_dim = 8, 8
    hidden_dims = [32, 32]

    key = jax.random.PRNGKey(0)
    kp, ks, kg = jax.random.split(key, 3)
    params = make_params(kp, state_dim, hidden_dims)
    packed = pack_params(params)
    state = jax.random.normal(ks, (B, state_dim), jnp.float32)
    goal = jax.random.normal(kg, (B, state_dim), jnp.float32)

    (mc, sc), (m2, s2), (m3, s3) = laplace_policy_forward(state, goal, packed)
    jax.block_until_ready((mc, sc, m2, s2, m3, s3))

    (rmc, rsc), (rm2, rs2), (rm3, rs3) = _reference(state, goal, params)
    for a, b in [(mc, rmc), (sc, rsc), (m2, rm2), (s2, rs2), (m3, rm3), (s3, rs3)]:
        np.testing.assert_allclose(np.asarray(a), np.asarray(b), rtol=1e-5, atol=1e-5)

    print("KERNEL_OK")
</pallas_src>

<mosaic_0001>
module attributes {stable_mosaic.version = 11 : i64} {
  func.func @_policy_kernel(%arg0: memref<8x16xf32, #tpu.memory_space<vmem>>, %arg1: memref<16x64xf32, #tpu.memory_space<vmem>>, %arg2: memref<1x64xf32, #tpu.memory_space<vmem>>, %arg3: memref<2x32x32xf32, #tpu.memory_space<vmem>>, %arg4: memref<2x1x32xf32, #tpu.memory_space<vmem>>, %arg5: memref<2x32x16xf32, #tpu.memory_space<vmem>>, %arg6: memref<2x1x16xf32, #tpu.memory_space<vmem>>, %arg7: memref<8x48xf32, #tpu.memory_space<vmem>>) attributes {dimension_semantics = [], scalar_prefetch = 0 : i64, scratch_operands = 0 : i64, tpu.core_type = #tpu.core_type<tc>} {
    %c0 = arith.constant 0 : index
    %c0_0 = arith.constant 0 : index
    %0 = vector.load %arg0[%c0, %c0_0] : memref<8x16xf32, #tpu.memory_space<vmem>>, vector<8x16xf32>
    %c0_1 = arith.constant 0 : index
    %c0_2 = arith.constant 0 : index
    %1 = vector.load %arg1[%c0_1, %c0_2] : memref<16x64xf32, #tpu.memory_space<vmem>>, vector<16x64xf32>
    %cst = arith.constant dense<0.000000e+00> : vector<8x64xf32>
    %2 = tpu.matmul %0, %1, %cst {dimension_numbers = #tpu.dot_dimension_numbers<[1], [0], [0], [1], [0, 0, 1, 1], [], []>} : vector<8x16xf32>, vector<16x64xf32>, vector<8x64xf32> -> vector<8x64xf32>
    %c0_3 = arith.constant 0 : index
    %c0_4 = arith.constant 0 : index
    %3 = vector.load %arg2[%c0_3, %c0_4] : memref<1x64xf32, #tpu.memory_space<vmem>>, vector<1x64xf32>
    %4 = vector.broadcast %3 : vector<1x64xf32> to vector<8x64xf32>
    %5 = arith.addf %2, %4 : vector<8x64xf32>
    %cst_5 = arith.constant 0.000000e+00 : f32
    %6 = vector.broadcast %cst_5 : f32 to vector<8x64xf32>
    %7 = arith.maximumf %5, %6 : vector<8x64xf32>
    %8 = vector.extract_strided_slice %7 {offsets = [0, 0], sizes = [8, 32], strides = [1, 1]} : vector<8x64xf32> to vector<8x32xf32>
    %c0_6 = arith.constant 0 : index
    %c0_7 = arith.constant 0 : index
    %c0_8 = arith.constant 0 : index
    %9 = vector.load %arg3[%c0_6, %c0_7, %c0_8] : memref<2x32x32xf32, #tpu.memory_space<vmem>>, vector<1x32x32xf32>
    %10 = vector.shape_cast %9 : vector<1x32x32xf32> to vector<32x32xf32>
    %cst_9 = arith.constant dense<0.000000e+00> : vector<8x32xf32>
    %11 = tpu.matmul %8, %10, %cst_9 {dimension_numbers = #tpu.dot_dimension_numbers<[1], [0], [0], [1], [0, 0, 1, 1], [], []>} : vector<8x32xf32>, vector<32x32xf32>, vector<8x32xf32> -> vector<8x32xf32>
    %c0_10 = arith.constant 0 : index
    %c0_11 = arith.constant 0 : index
    %c0_12 = arith.constant 0 : index
    %12 = vector.load %arg4[%c0_10, %c0_11, %c0_12] : memref<2x1x32xf32, #tpu.memory_space<vmem>>, vector<1x1x32xf32>
    %13 = vector.shape_cast %12 : vector<1x1x32xf32> to vector<1x32xf32>
    %14 = vector.broadcast %13 : vector<1x32xf32> to vector<8x32xf32>
    %15 = arith.addf %11, %14 : vector<8x32xf32>
    %cst_13 = arith.constant 0.000000e+00 : f32
    %16 = vector.broadcast %cst_13 : f32 to vector<8x32xf32>
    %17 = arith.maximumf %15, %16 : vector<8x32xf32>
    %c0_14 = arith.constant 0 : index
    %c0_15 = arith.constant 0 : index
    %c0_16 = arith.constant 0 : index
    %18 = vector.load %arg5[%c0_14, %c0_15, %c0_16] : memref<2x32x16xf32, #tpu.memory_space<vmem>>, vector<1x32x16xf32>
    %19 = vector.shape_cast %18 : vector<1x32x16xf32> to vector<32x16xf32>
    %cst_17 = arith.constant dense<0.000000e+00> : vector<8x16xf32>
    %20 = tpu.matmul %17, %19, %cst_17 {dimension_numbers = #tpu.dot_dimension_numbers<[1], [0], [0], [1], [0, 0, 1, 1], [], []>} : vector<8x32xf32>, vector<32x16xf32>, vector<8x16xf32> -> vector<8x16xf32>
    %c0_18 = arith.constant 0 : index
    %c0_19 = arith.constant 0 : index
    %c0_20 = arith.constant 0 : index
    %21 = vector.load %arg6[%c0_18, %c0_19, %c0_20] : memref<2x1x16xf32, #tpu.memory_space<vmem>>, vector<1x1x16xf32>
    %22 = vector.shape_cast %21 : vector<1x1x16xf32> to vector<1x16xf32>
    %23 = vector.broadcast %22 : vector<1x16xf32> to vector<8x16xf32>
    %24 = arith.addf %20, %23 : vector<8x16xf32>
    %25 = vector.extract_strided_slice %24 {offsets = [0, 0], sizes = [8, 8], strides = [1, 1]} : vector<8x16xf32> to vector<8x8xf32>
    %26 = vector.extract_strided_slice %24 {offsets = [0, 8], sizes = [8, 8], strides = [1, 1]} : vector<8x16xf32> to vector<8x8xf32>
    %cst_21 = arith.constant -2.000000e+01 : f32
    %cst_22 = arith.constant 2.000000e+00 : f32
    %27 = vector.broadcast %cst_21 : f32 to vector<8x8xf32>
    %28 = arith.maximumf %27, %26 : vector<8x8xf32>
    %29 = vector.broadcast %cst_22 : f32 to vector<8x8xf32>
    %30 = arith.minimumf %29, %28 : vector<8x8xf32>
    %31 = math.exp %30 : vector<8x8xf32>
    %32 = vector.extract_strided_slice %7 {offsets = [0, 32], sizes = [8, 32], strides = [1, 1]} : vector<8x64xf32> to vector<8x32xf32>
    %c1 = arith.constant 1 : index
    %c0_23 = arith.constant 0 : index
    %c0_24 = arith.constant 0 : index
    %33 = vector.load %arg3[%c1, %c0_23, %c0_24] : memref<2x32x32xf32, #tpu.memory_space<vmem>>, vector<1x32x32xf32>
    %34 = vector.shape_cast %33 : vector<1x32x32xf32> to vector<32x32xf32>
    %cst_25 = arith.constant dense<0.000000e+00> : vector<8x32xf32>
    %35 = tpu.matmul %32, %34, %cst_25 {dimension_numbers = #tpu.dot_dimension_numbers<[1], [0], [0], [1], [0, 0, 1, 1], [], []>} : vector<8x32xf32>, vector<32x32xf32>, vector<8x32xf32> -> vector<8x32xf32>
    %c1_26 = arith.constant 1 : index
    %c0_27 = arith.constant 0 : index
    %c0_28 = arith.constant 0 : index
    %36 = vector.load %arg4[%c1_26, %c0_27, %c0_28] : memref<2x1x32xf32, #tpu.memory_space<vmem>>, vector<1x1x32xf32>
    %37 = vector.shape_cast %36 : vector<1x1x32xf32> to vector<1x32xf32>
    %38 = vector.broadcast %37 : vector<1x32xf32> to vector<8x32xf32>
    %39 = arith.addf %35, %38 : vector<8x32xf32>
    %cst_29 = arith.constant 0.000000e+00 : f32
    %40 = vector.broadcast %cst_29 : f32 to vector<8x32xf32>
    %41 = arith.maximumf %39, %40 : vector<8x32xf32>
    %c1_30 = arith.constant 1 : index
    %c0_31 = arith.constant 0 : index
    %c0_32 = arith.constant 0 : index
    %42 = vector.load %arg5[%c1_30, %c0_31, %c0_32] : memref<2x32x16xf32, #tpu.memory_space<vmem>>, vector<1x32x16xf32>
    %43 = vector.shape_cast %42 : vector<1x32x16xf32> to vector<32x16xf32>
    %cst_33 = arith.constant dense<0.000000e+00> : vector<8x16xf32>
    %44 = tpu.matmul %41, %43, %cst_33 {dimension_numbers = #tpu.dot_dimension_numbers<[1], [0], [0], [1], [0, 0, 1, 1], [], []>} : vector<8x32xf32>, vector<32x16xf32>, vector<8x16xf32> -> vector<8x16xf32>
    %c1_34 = arith.constant 1 : index
    %c0_35 = arith.constant 0 : index
    %c0_36 = arith.constant 0 : index
    %45 = vector.load %arg6[%c1_34, %c0_35, %c0_36] : memref<2x1x16xf32, #tpu.memory_space<vmem>>, vector<1x1x16xf32>
    %46 = vector.shape_cast %45 : vector<1x1x16xf32> to vector<1x16xf32>
    %47 = vector.broadcast %46 : vector<1x16xf32> to vector<8x16xf32>
    %48 = arith.addf %44, %47 : vector<8x16xf32>
    %49 = vector.extract_strided_slice %48 {offsets = [0, 0], sizes = [8, 8], strides = [1, 1]} : vector<8x16xf32> to vector<8x8xf32>
    %50 = vector.extract_strided_slice %48 {offsets = [0, 8], sizes = [8, 8], strides = [1, 1]} : vector<8x16xf32> to vector<8x8xf32>
    %cst_37 = arith.constant -2.000000e+01 : f32
    %cst_38 = arith.constant 2.000000e+00 : f32
    %51 = vector.broadcast %cst_37 : f32 to vector<8x8xf32>
    %52 = arith.maximumf %51, %50 : vector<8x8xf32>
    %53 = vector.broadcast %cst_38 : f32 to vector<8x8xf32>
    %54 = arith.minimumf %53, %52 : vector<8x8xf32>
    %55 = math.exp %54 : vector<8x8xf32>
    %56 = arith.addf %49, %25 : vector<8x8xf32>
    %cst_39 = arith.constant 5.000000e-01 : f32
    %57 = vector.broadcast %cst_39 : f32 to vector<8x8xf32>
    %58 = arith.mulf %56, %57 : vector<8x8xf32>
    %59 = arith.addf %55, %31 : vector<8x8xf32>
    %cst_40 = arith.constant 5.000000e-01 : f32
    %60 = vector.broadcast %cst_40 : f32 to vector<8x8xf32>
    %61 = arith.mulf %59, %60 : vector<8x8xf32>
    %62 = tpu.concatenate %58, %61, %49, %55, %25, %31 in 1 : vector<8x8xf32>, vector<8x8xf32>, vector<8x8xf32>, vector<8x8xf32>, vector<8x8xf32>, vector<8x8xf32> -> vector<8x48xf32>
    %c0_41 = arith.constant 0 : index
    %c0_42 = arith.constant 0 : index
    %63 = vector.load %arg7[%c0_41, %c0_42] : memref<8x48xf32, #tpu.memory_space<vmem>>, vector<8x48xf32>
    tpu.vector_store %arg7[%c0_41, %c0_42], %62 {strides = array<i32>} : memref<8x48xf32, #tpu.memory_space<vmem>>, vector<8x48xf32>,
    return
  }
}

</mosaic_0001>

<llo_original>
// kernel: tpu_custom_call.1
$region0: #{tpu_custom_call.1}
  #allocation0 [shape = 'u32[]', space=smem, size = 0x4, offset = 0x4, fixed_abs, tag = 'smem constant byte address 0x4 - core index']
  #allocation1 [shape = 'u32[72,128]{1,0:T(1,128)}', space=vmem, size = 0x9000, scoped, tag = 'internal scratch']
  %s0 = inlined_call_operand.vmem [shape: f32[8,16], index: 0, kind: input, shape index: {}]
  %s1 = inlined_call_operand.vmem [shape: f32[16,64], index: 1, kind: input, shape index: {}]
  %s2 = inlined_call_operand.vmem [shape: f32[1,64], index: 2, kind: input, shape index: {}]
  %s3 = inlined_call_operand.vmem [shape: f32[2,32,32], index: 3, kind: input, shape index: {}]
  %s4 = inlined_call_operand.vmem [shape: f32[2,1,32], index: 4, kind: input, shape index: {}]
  %s5 = inlined_call_operand.vmem [shape: f32[2,32,16], index: 5, kind: input, shape index: {}]
  %s6 = inlined_call_operand.vmem [shape: f32[2,1,16], index: 6, kind: input, shape index: {}]
  %s7 = inlined_call_operand.hbm [shape: f32[8,48], index: 7, kind: output, shape index: {}]
  %s8 = sld [smem:[#allocation0]]
  $region38: #{tpu_custom_call.1} parent=0
    _
  %s10 = ssub.s32 1, %s8
  %s11 = scalar_select 0, %s10, %s8
  $region1: #{tpu_custom_call.1} parent=0
    #allocation2 [shape = 'u8[4096]{0}', space=vmem, size = 0x1000, scoped, tag = 'output window, operand 0, single buffered']
    #allocation3 [shape = 's32[1]{0}', space=sflag, size = 0x4, scoped, tag = 'scoped memory for tpu_custom_call.1']
    %12 = vsyncpa [#allocation3], 0
    // Predicated region
    $region2: #{tpu_custom_call.1} parent=1 // pred_check
      _
    $region3: #{tpu_custom_call.1} parent=1 // pred_check_branch
      %14 = sbr.rel (0) target = $region5
    $region4: #{tpu_custom_call.1} parent=1 // pred_region
      _
    $region5: #{tpu_custom_call.1} parent=1 // pred_fallthru
      _
    // Predicated region
    $region6: #{tpu_custom_call.1} parent=1 // pred_check
      _
    $region7: #{tpu_custom_call.1} parent=1 // pred_check_branch
      %16 = sbr.rel (0) target = $region9
    $region8: #{tpu_custom_call.1} parent=1 // pred_region
      _
    $region9: #{tpu_custom_call.1} parent=1 // pred_fallthru
      _
    // Predicated region
    $region10: #{tpu_custom_call.1} parent=1 // pred_check
      _
    $region11: #{tpu_custom_call.1} parent=1 // pred_check_branch
      %18 = sbr.rel (0) target = $region13
    $region12: #{tpu_custom_call.1} parent=1 // pred_region
      _
    $region13: #{tpu_custom_call.1} parent=1 // pred_fallthru
      _
    // Predicated region
    $region14: #{tpu_custom_call.1} parent=1 // pred_check
      _
    $region15: #{tpu_custom_call.1} parent=1 // pred_check_branch
      %20 = sbr.rel (0) target = $region17
    $region16: #{tpu_custom_call.1} parent=1 // pred_region
      _
    $region17: #{tpu_custom_call.1} parent=1 // pred_fallthru
      _
    // Predicated region
    $region18: #{tpu_custom_call.1} parent=1 // pred_check
      _
    $region19: #{tpu_custom_call.1} parent=1 // pred_check_branch
      %22 = sbr.rel (0) target = $region21
    $region20: #{tpu_custom_call.1} parent=1 // pred_region
      _
    $region21: #{tpu_custom_call.1} parent=1 // pred_fallthru
      _
    // Predicated region
    $region22: #{tpu_custom_call.1} parent=1 // pred_check
      _
    $region23: #{tpu_custom_call.1} parent=1 // pred_check_branch
      %24 = sbr.rel (0) target = $region25
    $region24: #{tpu_custom_call.1} parent=1 // pred_region
      _
    $region25: #{tpu_custom_call.1} parent=1 // pred_fallthru
      _
    // Predicated region
    $region26: #{tpu_custom_call.1} parent=1 // pred_check
      _
    $region27: #{tpu_custom_call.1} parent=1 // pred_check_branch
      %26 = sbr.rel (0) target = $region29
    $region28: #{tpu_custom_call.1} parent=1 // pred_region
      _
    $region29: #{tpu_custom_call.1} parent=1 // pred_fallthru
      _
    %v27 = vld [vmem:[%s0] sm:$0xff]
    %v28 = vld [vmem:[%s1] sm:$0xff]
    %v29 = vld [vmem:[%s1 + $0x8] sm:$0xff]
    %v30 = vld [vmem:[%s2] sm:$0x1]
    %v32 = vperm.slane %v30, 0
    %vm34 = vcmask 130048
    %v36 = vsel %vm34, %v27, 0
    %38 = vmatpush.msra.mxu0 0.0
    %39 = vmatpush.msra.mxu0 0.0
    %40 = vmatpush.msra.mxu0 0.0
    %41 = vmatpush.msra.mxu0 0.0
    %42 = vmatpush.msra.mxu0 0.0
    %43 = vmatpush.msra.mxu0 0.0
    %44 = vmatpush.msra.mxu0 0.0
    %45 = vmatpush.msra.mxu0 0.0
    %46 = vmatpush.msra.mxu0 0.0
    %47 = vmatpush.msra.mxu0 0.0
    %48 = vmatpush.msra.mxu0 0.0
    %49 = vmatpush.msra.mxu0 0.0
    %50 = vmatpush.msra.mxu0 0.0
    %51 = vmatpush.msra.mxu0 0.0
    %52 = vmatpush.msra.mxu0 %v29
    %53 = vmatpush.msra.mxu0 %v28
    %54 = vmatmul.f32.gmra.mxu0 %v36
    %v55 = vpop.f32.mrf.mxu0
    %v56 = vadd.f32 %v32, %v55
    %57 = vdwg.mxu0
    %v58 = vmax.f32 %v56, 0.0
    %v59 = vld [vmem:[%s3] sm:$0xff]
    %v60 = vld [vmem:[%s3 + $0x8] sm:$0xff]
    %v61 = vld [vmem:[%s3 + $0x10] sm:$0xff]
    %v62 = vld [vmem:[%s3 + $0x18] sm:$0xff]
    %v63 = vld [vmem:[%s4] sm:$0x1]
    %v65 = vperm.slane %v63, 0
    %vm67 = vcmask 261120
    %v69 = vsel %vm67, %v58, 0
    %71 = vmatpush.msra.mxu0 0.0
    %72 = vmatpush.msra.mxu0 0.0
    %73 = vmatpush.msra.mxu0 0.0
    %74 = vmatpush.msra.mxu0 0.0
    %75 = vmatpush.msra.mxu0 0.0
    %76 = vmatpush.msra.mxu0 0.0
    %77 = vmatpush.msra.mxu0 0.0
    %78 = vmatpush.msra.mxu0 0.0
    %79 = vmatpush.msra.mxu0 0.0
    %80 = vmatpush.msra.mxu0 0.0
    %81 = vmatpush.msra.mxu0 0.0
    %82 = vmatpush.msra.mxu0 0.0
    %83 = vmatpush.msra.mxu0 %v62
    %84 = vmatpush.msra.mxu0 %v61
    %85 = vmatpush.msra.mxu0 %v60
    %86 = vmatpush.msra.mxu0 %v59
    %87 = vmatmul.f32.gmra.mxu0 %v69
    %v88 = vpop.f32.mrf.mxu0
    %v89 = vadd.f32 %v65, %v88
    %90 = vdwg.mxu0
    %v91 = vmax.f32 %v89, 0.0
    %v92 = vld [vmem:[%s5] sm:$0xff]
    %v93 = vld [vmem:[%s5 + $0x8] sm:$0xff]
    %v94 = vld [vmem:[%s5 + $0x10] sm:$0xff]
    %v95 = vld [vmem:[%s5 + $0x18] sm:$0xff]
    %v96 = vld [vmem:[%s6] sm:$0x1]
    %v98 = vperm.slane %v96, 0
    %v101 = vsel %vm67, %v91, 0
    %103 = vmatpush.msra.mxu0 0.0
    %104 = vmatpush.msra.mxu0 0.0
    %105 = vmatpush.msra.mxu0 0.0
    %106 = vmatpush.msra.mxu0 0.0
    %107 = vmatpush.msra.mxu0 0.0
    %108 = vmatpush.msra.mxu0 0.0
    %109 = vmatpush.msra.mxu0 0.0
    %110 = vmatpush.msra.mxu0 0.0
    %111 = vmatpush.msra.mxu0 0.0
    %112 = vmatpush.msra.mxu0 0.0
    %113 = vmatpush.msra.mxu0 0.0
    %114 = vmatpush.msra.mxu0 0.0
    %115 = vmatpush.msra.mxu0 %v95
    %116 = vmatpush.msra.mxu0 %v94
    %117 = vmatpush.msra.mxu0 %v93
    %118 = vmatpush.msra.mxu0 %v92
    %119 = vmatmul.f32.gmra.mxu0 %v101
    %v120 = vpop.f32.mrf.mxu0
    %v121 = vadd.f32 %v98, %v120
    %122 = vdwg.mxu0
    %v123 = vmax.f32 %v121, -20.0
    %v124 = vmin.f32 %v123, 2.0
    %v125 = vmul.f32 %v124, 1.442695
    %v126 = vpow.pop %v125
    %s127 = scalar_lea.vmem %s3, 32
    %v128 = vld [vmem:[%s127] sm:$0xff]
    %v129 = vld [vmem:[%s127 + $0x8] sm:$0xff]
    %v130 = vld [vmem:[%s127 + $0x10] sm:$0xff]
    %v131 = vld [vmem:[%s127 + $0x18] sm:$0xff]
    %s132 = scalar_lea.vmem %s4, 1
    %v133 = vld [vmem:[%s132] sm:$0x1]
    %v135 = vperm.slane %v133, 0
    %137 = vrot.lane.b32.xlu0 %v58, 96
    %v138 = vpop.permute.xlu0 %137
    %v139 = vsel %vm67, %v138, 0
    %141 = vmatpush.msra.mxu0 0.0
    %142 = vmatpush.msra.mxu0 0.0
    %143 = vmatpush.msra.mxu0 0.0
    %144 = vmatpush.msra.mxu0 0.0
    %145 = vmatpush.msra.mxu0 0.0
    %146 = vmatpush.msra.mxu0 0.0
    %147 = vmatpush.msra.mxu0 0.0
    %148 = vmatpush.msra.mxu0 0.0
    %149 = vmatpush.msra.mxu0 0.0
    %150 = vmatpush.msra.mxu0 0.0
    %151 = vmatpush.msra.mxu0 0.0
    %152 = vmatpush.msra.mxu0 0.0
    %153 = vmatpush.msra.mxu0 %v131
    %154 = vmatpush.msra.mxu0 %v130
    %155 = vmatpush.msra.mxu0 %v129
    %156 = vmatpush.msra.mxu0 %v128
    %157 = vmatmul.f32.gmra.mxu0 %v139
    %v158 = vpop.f32.mrf.mxu0
    %v159 = vadd.f32 %v135, %v158
    %160 = vdwg.mxu0
    %v161 = vmax.f32 %v159, 0.0
    %s162 = scalar_lea.vmem %s5, 32
    %v163 = vld [vmem:[%s162] sm:$0xff]
    %v164 = vld [vmem:[%s162 + $0x8] sm:$0xff]
    %v165 = vld [vmem:[%s162 + $0x10] sm:$0xff]
    %v166 = vld [vmem:[%s162 + $0x18] sm:$0xff]
    %s167 = scalar_lea.vmem %s6, 1
    %v168 = vld [vmem:[%s167] sm:$0x1]
    %v170 = vperm.slane %v168, 0
    %v173 = vsel %vm67, %v161, 0
    %175 = vmatpush.msra.mxu0 0.0
    %176 = vmatpush.msra.mxu0 0.0
    %177 = vmatpush.msra.mxu0 0.0
    %178 = vmatpush.msra.mxu0 0.0
    %179 = vmatpush.msra.mxu0 0.0
    %180 = vmatpush.msra.mxu0 0.0
    %181 = vmatpush.msra.mxu0 0.0
    %182 = vmatpush.msra.mxu0 0.0
    %183 = vmatpush.msra.mxu0 0.0
    %184 = vmatpush.msra.mxu0 0.0
    %185 = vmatpush.msra.mxu0 0.0
    %186 = vmatpush.msra.mxu0 0.0
    %187 = vmatpush.msra.mxu0 %v166
    %188 = vmatpush.msra.mxu0 %v165
    %189 = vmatpush.msra.mxu0 %v164
    %190 = vmatpush.msra.mxu0 %v163
    %191 = vmatmul.f32.gmra.mxu0 %v173
    %v192 = vpop.f32.mrf.mxu0
    %v193 = vadd.f32 %v170, %v192
    %194 = vdwg.mxu0
    %v195 = vmax.f32 %v193, -20.0
    %v196 = vmin.f32 %v195, 2.0
    %v197 = vmul.f32 %v196, 1.442695
    %v198 = vpow.pop %v197
    %v199 = vadd.f32 %v193, %v121
    %v200 = vmul.f32 %v199, 0.5
    %v201 = vadd.f32 %v198, %v126
    %v202 = vmul.f32 %v201, 0.5
    %204 = vrot.lane.b32.xlu0 %v193, 16
    %v205 = vpop.permute.xlu0 %204
    %208 = vrot.lane.b32.xlu0 %v198, 16
    %v209 = vpop.permute.xlu0 %208
    %212 = vrot.lane.b32.xlu0 %v121, 32
    %v213 = vpop.permute.xlu0 %212
    %216 = vrot.lane.b32.xlu0 %v126, 32
    %v217 = vpop.permute.xlu0 %216
    %vm219 = vcmask 64512
    %v220 = vsel %vm219, %v200, %v202
    %v221 = vsel %vm34, %v220, %v205
    %vm222 = vcmask 195584
    %v223 = vsel %vm222, %v221, %v209
    %v224 = vsel %vm67, %v223, %v213
    %vm225 = vcmask 326656
    %v226 = vsel %vm225, %v224, %v217
    %vm227 = vcmask 392192
    %228 = vst.msk [vmem:[#allocation2] sm:$0xff] %vm227, %v226
    // Predicated region
    $region30: #{tpu_custom_call.1} parent=1 // pred_check
      _
    $region31: #{tpu_custom_call.1} parent=1 // pred_check_branch
      %230 = sbr.rel (0) target = $region33
    $region32: #{tpu_custom_call.1} parent=1 // pred_region
      %232 = vsyncadd [#allocation3], 0
      %s234 = sshll.u32 [#allocation2], 4
      %s235 = int_to_ptr.vmem [resolvable:$true] %s234
      %s236 = sshll.u32 %s7, 4
      %s237 = int_to_ptr.hbm [resolvable:$true] %s236
      %239 = dma.vmem_to_hbm [thread:$0]  %s235, 128, %s237, [#allocation3]
    $region33: #{tpu_custom_call.1} parent=1 // pred_fallthru
      _
    // Predicated region
    $region34: #{tpu_custom_call.1} parent=1 // pred_check
      _
    $region35: #{tpu_custom_call.1} parent=1 // pred_check_branch
      %241 = sbr.rel (0) target = $region37
    $region36: #{tpu_custom_call.1} parent=1 // pred_region
      %243 = dma.done [#allocation3], 128
    $region37: #{tpu_custom_call.1} parent=1 // pred_fallthru
      _
    %244 = vsyncpa [#allocation3], 1

</llo_original>
